<compile_context>
chip_gen: v6e
topology: v6e:2x2x1
jax: 0.10.0
libtpu: 0.0.40
codegen_flags: <defaults>
</compile_context>

<pallas_src>
import functools

import jax
import jax.numpy as jnp
from jax.experimental import pallas as pl
from jax.experimental.pallas import tpu as pltpu


def _round_up(n, m):
    return ((n + m - 1) // m) * m


def _generator_kernel(x_ref, p_ref,
                      w1x_ref, w1p_ref, b1_ref,
                      w2_ref, b2_ref,
                      w3_ref, b3_ref,
                      w4_ref, b4_ref,
                      w5_ref, b5_ref,
                      out_ref):
    """One batch-tile of the Generator forward pass, fully VMEM-resident."""
    negative_slope = jnp.float32(0.01)  # nn.LeakyReLU() default

    def leaky_relu(v):
        return jnp.where(v > 0, v, negative_slope * v)

    wdt = w1x_ref.dtype  # weight dtype (bf16 by default); matmuls run on the MXU
                         # in this dtype with f32 accumulation.

    # Layer 1: split-matmul replaces torch.cat([x, property], 1) @ W1.
    h = (jnp.dot(x_ref[...].astype(wdt), w1x_ref[...],
                 preferred_element_type=jnp.float32)
         + jnp.dot(p_ref[...].astype(wdt), w1p_ref[...],
                   preferred_element_type=jnp.float32)
         + b1_ref[...])
    h = leaky_relu(h)

    # Layers 2..4: Linear + LeakyReLU, activations kept in f32 between layers.
    for w_ref, b_ref in ((w2_ref, b2_ref), (w3_ref, b3_ref), (w4_ref, b4_ref)):
        h = leaky_relu(
            jnp.dot(h.astype(wdt), w_ref[...],
                    preferred_element_type=jnp.float32) + b_ref[...])

    # Layer 5 (no activation) -> softmax along last axis (all in f32).
    logits = (jnp.dot(h.astype(wdt), w5_ref[...],
                      preferred_element_type=jnp.float32) + b5_ref[...])
    m = jnp.max(logits, axis=-1, keepdims=True)
    e = jnp.exp(logits - m)
    denom = jnp.sum(e, axis=-1, keepdims=True)
    out_ref[...] = e * pl.reciprocal(denom, approx=True)


def generator_forward(x, prop, params, *, block_batch=256):
    """JAX wrapper: batch-tiled pallas_call for the whole MLP (no concat op)."""
    B, x_feat = x.shape
    p_feat = prop.shape[1]
    input_length = params["w5"].shape[1]

    # Choose a batch tile: multiple of 8 sublanes, at most `block_batch` rows.
    tb = min(_round_up(block_batch, 8), _round_up(B, 8))
    Bp = _round_up(B, tb)
    if Bp != B:
        x = jnp.pad(x, ((0, Bp - B), (0, 0)))
        prop = jnp.pad(prop, ((0, Bp - B), (0, 0)))
    grid = (Bp // tb,)

    # Split W1 along its input dim once (constant weight slice, traced outside
    # the kernel); equivalent to concatenating x and prop before the matmul.
    w1 = params["w1"]
    w1x = w1[:x_feat, :]
    w1p = w1[x_feat:, :]

    operands = (
        x, prop,
        w1x, w1p, params["b1"],
        params["w2"], params["b2"],
        params["w3"], params["b3"],
        params["w4"], params["b4"],
        params["w5"], params["b5"],
    )

    def batch_spec(feat):
        return pl.BlockSpec((tb, feat), lambda i: (i, 0))

    def const_spec(arr):
        # Whole-array block, same block index every grid step -> stays resident.
        return pl.BlockSpec(arr.shape, lambda i: (0, 0))

    in_specs = [batch_spec(x_feat), batch_spec(p_feat)] + \
               [const_spec(a) for a in operands[2:]]

    out = pl.pallas_call(
        _generator_kernel,
        out_shape=jax.ShapeDtypeStruct((Bp, input_length), jnp.float32),
        grid_spec=pltpu.PrefetchScalarGridSpec(
            num_scalar_prefetch=0,
            grid=grid,
            in_specs=in_specs,
            out_specs=batch_spec(input_length),
        ),
        compiler_params=pltpu.CompilerParams(
            dimension_semantics=("parallel",)),
    )(*operands)

    return out[:B] if Bp != B else out


def init_params(key, latent_dim, input_length, hidden_size,
                param_dtype=jnp.bfloat16):
    """Deterministic PyTorch-style init: U(-1/sqrt(fan_in), 1/sqrt(fan_in)).
    Weights stored as (in_features, out_features) in `param_dtype` (bf16 for
    the bf16-native MXU); biases kept (1, fan_out) in f32."""
    dims = [(latent_dim, hidden_size),
            (hidden_size, hidden_size),
            (hidden_size, hidden_size),
            (hidden_size, hidden_size),
            (hidden_size, input_length)]
    params = {}
    for i, (fan_in, fan_out) in enumerate(dims, start=1):
        key, kw, kb = jax.random.split(key, 3)
        bound = 1.0 / jnp.sqrt(jnp.float32(fan_in))
        params[f"w{i}"] = jax.random.uniform(
            kw, (fan_in, fan_out), jnp.float32, -bound, bound).astype(param_dtype)
        params[f"b{i}"] = jax.random.uniform(
            kb, (1, fan_out), jnp.float32, -bound, bound)
    return params


if __name__ == "__main__":
    # Small, forward-consistent shapes:
    #   latent_dim = x_features + property_features (concat must match layer-1 fan_in)
    # TODO(synk): for peak TPU efficiency hidden_size / input_length should be
    # 128-lane multiples; kept at the module's small sizes here.
    batch = 4
    x_features = 12
    prop_features = 4
    latent_dim = x_features + prop_features   # 16
    hidden_size = 32
    input_length = 8

    key = jax.random.PRNGKey(0)
    key, kx, kp = jax.random.split(key, 3)
    x = jax.random.normal(kx, (batch, x_features), jnp.float32)
    prop = jax.random.normal(kp, (batch, prop_features), jnp.float32)

    params = init_params(key, latent_dim, input_length, hidden_size)

    out = generator_forward(x, prop, params)
    out = jax.block_until_ready(out)

    # sanity: shape and softmax rows ~sum to 1 (bf16 weights + approx reciprocal)
    assert out.shape == (batch, input_length)
    assert jnp.allclose(jnp.sum(out, axis=-1), 1.0, atol=1e-2)

    print("KERNEL_OK")
</pallas_src>

<mosaic_0001>
module attributes {stable_mosaic.version = 11 : i64} {
  func.func @_generator_kernel(%arg0: i32, %arg1: memref<8x12xf32, #tpu.memory_space<vmem>>, %arg2: memref<8x4xf32, #tpu.memory_space<vmem>>, %arg3: memref<12x32xbf16, #tpu.memory_space<vmem>>, %arg4: memref<4x32xbf16, #tpu.memory_space<vmem>>, %arg5: memref<1x32xf32, #tpu.memory_space<vmem>>, %arg6: memref<32x32xbf16, #tpu.memory_space<vmem>>, %arg7: memref<1x32xf32, #tpu.memory_space<vmem>>, %arg8: memref<32x32xbf16, #tpu.memory_space<vmem>>, %arg9: memref<1x32xf32, #tpu.memory_space<vmem>>, %arg10: memref<32x32xbf16, #tpu.memory_space<vmem>>, %arg11: memref<1x32xf32, #tpu.memory_space<vmem>>, %arg12: memref<32x8xbf16, #tpu.memory_space<vmem>>, %arg13: memref<1x8xf32, #tpu.memory_space<vmem>>, %arg14: memref<8x8xf32, #tpu.memory_space<vmem>>) attributes {dimension_semantics = [#tpu.dimension_semantics<parallel>], iteration_bounds = array<i64: 1>, scalar_prefetch = 0 : i64, scratch_operands = 0 : i64, tpu.core_type = #tpu.core_type<tc>, window_params = [{transform_indices = @transform_0, window_bounds = array<i64: 8, 12>}, {transform_indices = @transform_1, window_bounds = array<i64: 8, 4>}, {pipeline_mode = #tpu.pipeline_mode<synchronous>, transform_indices = @transform_2, window_bounds = array<i64: 12, 32>}, {pipeline_mode = #tpu.pipeline_mode<synchronous>, transform_indices = @transform_3, window_bounds = array<i64: 4, 32>}, {pipeline_mode = #tpu.pipeline_mode<synchronous>, transform_indices = @transform_4, window_bounds = array<i64: 1, 32>}, {pipeline_mode = #tpu.pipeline_mode<synchronous>, transform_indices = @transform_5, window_bounds = array<i64: 32, 32>}, {pipeline_mode = #tpu.pipeline_mode<synchronous>, transform_indices = @transform_6, window_bounds = array<i64: 1, 32>}, {pipeline_mode = #tpu.pipeline_mode<synchronous>, transform_indices = @transform_7, window_bounds = array<i64: 32, 32>}, {pipeline_mode = #tpu.pipeline_mode<synchronous>, transform_indices = @transform_8, window_bounds = array<i64: 1, 32>}, {pipeline_mode = #tpu.pipeline_mode<synchronous>, transform_indices = @transform_9, window_bounds = array<i64: 32, 32>}, {pipeline_mode = #tpu.pipeline_mode<synchronous>, transform_indices = @transform_10, window_bounds = array<i64: 1, 32>}, {pipeline_mode = #tpu.pipeline_mode<synchronous>, transform_indices = @transform_11, window_bounds = array<i64: 32, 8>}, {pipeline_mode = #tpu.pipeline_mode<synchronous>, transform_indices = @transform_12, window_bounds = array<i64: 1, 8>}, {transform_indices = @transform_13, window_bounds = array<i64: 8, 8>}]} {
    %c0 = arith.constant 0 : index
    %c0_0 = arith.constant 0 : index
    %0 = vector.load %arg1[%c0, %c0_0] : memref<8x12xf32, #tpu.memory_space<vmem>>, vector<8x12xf32>
    %1 = arith.truncf %0 : vector<8x12xf32> to vector<8x12xbf16>
    %c0_1 = arith.constant 0 : index
    %c0_2 = arith.constant 0 : index
    %2 = vector.load %arg3[%c0_1, %c0_2] : memref<12x32xbf16, #tpu.memory_space<vmem>>, vector<12x32xbf16>
    %cst = arith.constant dense<0.000000e+00> : vector<8x32xf32>
    %3 = tpu.matmul %1, %2, %cst {dimension_numbers = #tpu.dot_dimension_numbers<[1], [0], [0], [1], [0, 0, 1, 1], [], []>} : vector<8x12xbf16>, vector<12x32xbf16>, vector<8x32xf32> -> vector<8x32xf32>
    %c0_3 = arith.constant 0 : index
    %c0_4 = arith.constant 0 : index
    %4 = vector.load %arg2[%c0_3, %c0_4] : memref<8x4xf32, #tpu.memory_space<vmem>>, vector<8x4xf32>
    %5 = arith.truncf %4 : vector<8x4xf32> to vector<8x4xbf16>
    %c0_5 = arith.constant 0 : index
    %c0_6 = arith.constant 0 : index
    %6 = vector.load %arg4[%c0_5, %c0_6] : memref<4x32xbf16, #tpu.memory_space<vmem>>, vector<4x32xbf16>
    %cst_7 = arith.constant dense<0.000000e+00> : vector<8x32xf32>
    %7 = tpu.matmul %5, %6, %cst_7 {dimension_numbers = #tpu.dot_dimension_numbers<[1], [0], [0], [1], [0, 0, 1, 1], [], []>} : vector<8x4xbf16>, vector<4x32xbf16>, vector<8x32xf32> -> vector<8x32xf32>
    %8 = arith.addf %3, %7 : vector<8x32xf32>
    %c0_8 = arith.constant 0 : index
    %c0_9 = arith.constant 0 : index
    %9 = vector.load %arg5[%c0_8, %c0_9] : memref<1x32xf32, #tpu.memory_space<vmem>>, vector<1x32xf32>
    %10 = vector.broadcast %9 : vector<1x32xf32> to vector<8x32xf32>
    %11 = arith.addf %8, %10 : vector<8x32xf32>
    %cst_10 = arith.constant 0.000000e+00 : f32
    %12 = vector.broadcast %cst_10 : f32 to vector<8x32xf32>
    %13 = arith.cmpf ogt, %11, %12 : vector<8x32xf32>
    %cst_11 = arith.constant 0.00999999977 : f32
    %14 = vector.broadcast %cst_11 : f32 to vector<8x32xf32>
    %15 = arith.mulf %14, %11 : vector<8x32xf32>
    %16 = arith.select %13, %11, %15 : vector<8x32xi1>, vector<8x32xf32>
    %17 = arith.truncf %16 : vector<8x32xf32> to vector<8x32xbf16>
    %c0_12 = arith.constant 0 : index
    %c0_13 = arith.constant 0 : index
    %18 = vector.load %arg6[%c0_12, %c0_13] : memref<32x32xbf16, #tpu.memory_space<vmem>>, vector<32x32xbf16>
    %cst_14 = arith.constant dense<0.000000e+00> : vector<8x32xf32>
    %19 = tpu.matmul %17, %18, %cst_14 {dimension_numbers = #tpu.dot_dimension_numbers<[1], [0], [0], [1], [0, 0, 1, 1], [], []>} : vector<8x32xbf16>, vector<32x32xbf16>, vector<8x32xf32> -> vector<8x32xf32>
    %c0_15 = arith.constant 0 : index
    %c0_16 = arith.constant 0 : index
    %20 = vector.load %arg7[%c0_15, %c0_16] : memref<1x32xf32, #tpu.memory_space<vmem>>, vector<1x32xf32>
    %21 = vector.broadcast %20 : vector<1x32xf32> to vector<8x32xf32>
    %22 = arith.addf %19, %21 : vector<8x32xf32>
    %cst_17 = arith.constant 0.000000e+00 : f32
    %23 = vector.broadcast %cst_17 : f32 to vector<8x32xf32>
    %24 = arith.cmpf ogt, %22, %23 : vector<8x32xf32>
    %cst_18 = arith.constant 0.00999999977 : f32
    %25 = vector.broadcast %cst_18 : f32 to vector<8x32xf32>
    %26 = arith.mulf %25, %22 : vector<8x32xf32>
    %27 = arith.select %24, %22, %26 : vector<8x32xi1>, vector<8x32xf32>
    %28 = arith.truncf %27 : vector<8x32xf32> to vector<8x32xbf16>
    %c0_19 = arith.constant 0 : index
    %c0_20 = arith.constant 0 : index
    %29 = vector.load %arg8[%c0_19, %c0_20] : memref<32x32xbf16, #tpu.memory_space<vmem>>, vector<32x32xbf16>
    %cst_21 = arith.constant dense<0.000000e+00> : vector<8x32xf32>
    %30 = tpu.matmul %28, %29, %cst_21 {dimension_numbers = #tpu.dot_dimension_numbers<[1], [0], [0], [1], [0, 0, 1, 1], [], []>} : vector<8x32xbf16>, vector<32x32xbf16>, vector<8x32xf32> -> vector<8x32xf32>
    %c0_22 = arith.constant 0 : index
    %c0_23 = arith.constant 0 : index
    %31 = vector.load %arg9[%c0_22, %c0_23] : memref<1x32xf32, #tpu.memory_space<vmem>>, vector<1x32xf32>
    %32 = vector.broadcast %31 : vector<1x32xf32> to vector<8x32xf32>
    %33 = arith.addf %30, %32 : vector<8x32xf32>
    %cst_24 = arith.constant 0.000000e+00 : f32
    %34 = vector.broadcast %cst_24 : f32 to vector<8x32xf32>
    %35 = arith.cmpf ogt, %33, %34 : vector<8x32xf32>
    %cst_25 = arith.constant 0.00999999977 : f32
    %36 = vector.broadcast %cst_25 : f32 to vector<8x32xf32>
    %37 = arith.mulf %36, %33 : vector<8x32xf32>
    %38 = arith.select %35, %33, %37 : vector<8x32xi1>, vector<8x32xf32>
    %39 = arith.truncf %38 : vector<8x32xf32> to vector<8x32xbf16>
    %c0_26 = arith.constant 0 : index
    %c0_27 = arith.constant 0 : index
    %40 = vector.load %arg10[%c0_26, %c0_27] : memref<32x32xbf16, #tpu.memory_space<vmem>>, vector<32x32xbf16>
    %cst_28 = arith.constant dense<0.000000e+00> : vector<8x32xf32>
    %41 = tpu.matmul %39, %40, %cst_28 {dimension_numbers = #tpu.dot_dimension_numbers<[1], [0], [0], [1], [0, 0, 1, 1], [], []>} : vector<8x32xbf16>, vector<32x32xbf16>, vector<8x32xf32> -> vector<8x32xf32>
    %c0_29 = arith.constant 0 : index
    %c0_30 = arith.constant 0 : index
    %42 = vector.load %arg11[%c0_29, %c0_30] : memref<1x32xf32, #tpu.memory_space<vmem>>, vector<1x32xf32>
    %43 = vector.broadcast %42 : vector<1x32xf32> to vector<8x32xf32>
    %44 = arith.addf %41, %43 : vector<8x32xf32>
    %cst_31 = arith.constant 0.000000e+00 : f32
    %45 = vector.broadcast %cst_31 : f32 to vector<8x32xf32>
    %46 = arith.cmpf ogt, %44, %45 : vector<8x32xf32>
    %cst_32 = arith.constant 0.00999999977 : f32
    %47 = vector.broadcast %cst_32 : f32 to vector<8x32xf32>
    %48 = arith.mulf %47, %44 : vector<8x32xf32>
    %49 = arith.select %46, %44, %48 : vector<8x32xi1>, vector<8x32xf32>
    %50 = arith.truncf %49 : vector<8x32xf32> to vector<8x32xbf16>
    %c0_33 = arith.constant 0 : index
    %c0_34 = arith.constant 0 : index
    %51 = vector.load %arg12[%c0_33, %c0_34] : memref<32x8xbf16, #tpu.memory_space<vmem>>, vector<32x8xbf16>
    %cst_35 = arith.constant dense<0.000000e+00> : vector<8x8xf32>
    %52 = tpu.matmul %50, %51, %cst_35 {dimension_numbers = #tpu.dot_dimension_numbers<[1], [0], [0], [1], [0, 0, 1, 1], [], []>} : vector<8x32xbf16>, vector<32x8xbf16>, vector<8x8xf32> -> vector<8x8xf32>
    %c0_36 = arith.constant 0 : index
    %c0_37 = arith.constant 0 : index
    %53 = vector.load %arg13[%c0_36, %c0_37] : memref<1x8xf32, #tpu.memory_space<vmem>>, vector<1x8xf32>
    %54 = vector.broadcast %53 : vector<1x8xf32> to vector<8x8xf32>
    %55 = arith.addf %52, %54 : vector<8x8xf32>
    %cst_38 = arith.constant dense<0xFF800000> : vector<8xf32>
    %56 = vector.multi_reduction <maximumf>, %55, %cst_38 [1] : vector<8x8xf32> to vector<8xf32>
    %57 = vector.shape_cast %56 : vector<8xf32> to vector<8x1xf32>
    %58 = vector.broadcast %57 : vector<8x1xf32> to vector<8x8xf32>
    %59 = arith.subf %55, %58 : vector<8x8xf32>
    %60 = math.exp %59 : vector<8x8xf32>
    %cst_39 = arith.constant dense<0.000000e+00> : vector<8xf32>
    %61 = vector.multi_reduction <add>, %60, %cst_39 [1] : vector<8x8xf32> to vector<8xf32>
    %62 = vector.shape_cast %61 : vector<8xf32> to vector<8x1xf32>
    %63 = tpu.reciprocal %62 {approx = true} : vector<8x1xf32> -> vector<8x1xf32>
    %64 = vector.broadcast %63 : vector<8x1xf32> to vector<8x8xf32>
    %65 = arith.mulf %60, %64 : vector<8x8xf32>
    %c0_40 = arith.constant 0 : index
    %c0_41 = arith.constant 0 : index
    %66 = vector.load %arg14[%c0_40, %c0_41] : memref<8x8xf32, #tpu.memory_space<vmem>>, vector<8x8xf32>
    tpu.vector_store %arg14[%c0_40, %c0_41], %65 {strides = array<i32>} : memref<8x8xf32, #tpu.memory_space<vmem>>, vector<8x8xf32>,
    return
  }
  func.func @transform_0(%arg0: i32) -> (i32, i32) {
    %c0_i32 = arith.constant 0 : i32
    %c0_i32_0 = arith.constant 0 : i32
    return %arg0, %c0_i32 : i32, i32
  }
  func.func @transform_1(%arg0: i32) -> (i32, i32) {
    %c0_i32 = arith.constant 0 : i32
    %c0_i32_0 = arith.constant 0 : i32
    return %arg0, %c0_i32 : i32, i32
  }
  func.func @transform_2(%arg0: i32) -> (i32, i32) {
    %c0_i32 = arith.constant 0 : i32
    %c0_i32_0 = arith.constant 0 : i32
    %c0_i32_1 = arith.constant 0 : i32
    return %c0_i32, %c0_i32_0 : i32, i32
  }
  func.func @transform_3(%arg0: i32) -> (i32, i32) {
    %c0_i32 = arith.constant 0 : i32
    %c0_i32_0 = arith.constant 0 : i32
    %c0_i32_1 = arith.constant 0 : i32
    return %c0_i32, %c0_i32_0 : i32, i32
  }
  func.func @transform_4(%arg0: i32) -> (i32, i32) {
    %c0_i32 = arith.constant 0 : i32
    %c0_i32_0 = arith.constant 0 : i32
    %c0_i32_1 = arith.constant 0 : i32
    return %c0_i32, %c0_i32_0 : i32, i32
  }
  func.func @transform_5(%arg0: i32) -> (i32, i32) {
    %c0_i32 = arith.constant 0 : i32
    %c0_i32_0 = arith.constant 0 : i32
    %c0_i32_1 = arith.constant 0 : i32
    return %c0_i32, %c0_i32_0 : i32, i32
  }
  func.func @transform_6(%arg0: i32) -> (i32, i32) {
    %c0_i32 = arith.constant 0 : i32
    %c0_i32_0 = arith.constant 0 : i32
    %c0_i32_1 = arith.constant 0 : i32
    return %c0_i32, %c0_i32_0 : i32, i32
  }
  func.func @transform_7(%arg0: i32) -> (i32, i32) {
    %c0_i32 = arith.constant 0 : i32
    %c0_i32_0 = arith.constant 0 : i32
    %c0_i32_1 = arith.constant 0 : i32
    return %c0_i32, %c0_i32_0 : i32, i32
  }
  func.func @transform_8(%arg0: i32) -> (i32, i32) {
    %c0_i32 = arith.constant 0 : i32
    %c0_i32_0 = arith.constant 0 : i32
    %c0_i32_1 = arith.constant 0 : i32
    return %c0_i32, %c0_i32_0 : i32, i32
  }
  func.func @transform_9(%arg0: i32) -> (i32, i32) {
    %c0_i32 = arith.constant 0 : i32
    %c0_i32_0 = arith.constant 0 : i32
    %c0_i32_1 = arith.constant 0 : i32
    return %c0_i32, %c0_i32_0 : i32, i32
  }
  func.func @transform_10(%arg0: i32) -> (i32, i32) {
    %c0_i32 = arith.constant 0 : i32
    %c0_i32_0 = arith.constant 0 : i32
    %c0_i32_1 = arith.constant 0 : i32
    return %c0_i32, %c0_i32_0 : i32, i32
  }
  func.func @transform_11(%arg0: i32) -> (i32, i32) {
    %c0_i32 = arith.constant 0 : i32
    %c0_i32_0 = arith.constant 0 : i32
    %c0_i32_1 = arith.constant 0 : i32
    return %c0_i32, %c0_i32_0 : i32, i32
  }
  func.func @transform_12(%arg0: i32) -> (i32, i32) {
    %c0_i32 = arith.constant 0 : i32
    %c0_i32_0 = arith.constant 0 : i32
    %c0_i32_1 = arith.constant 0 : i32
    return %c0_i32, %c0_i32_0 : i32, i32
  }
  func.func @transform_13(%arg0: i32) -> (i32, i32) {
    %c0_i32 = arith.constant 0 : i32
    %c0_i32_0 = arith.constant 0 : i32
    return %arg0, %c0_i32 : i32, i32
  }
}

</mosaic_0001>

<llo_original>
// kernel: tpu_custom_call.1
$region0: #{tpu_custom_call.1}
  #allocation0 [shape = 'u32[]', space=smem, size = 0x4, offset = 0x4, fixed_abs, tag = 'smem constant byte address 0x4 - core index']
  #allocation1 [shape = 'u32[144,128]{1,0:T(1,128)}', space=vmem, size = 0x12000, scoped, tag = 'internal scratch']
  %s0 = inlined_call_operand.hbm [shape: f32[8,12], index: 0, kind: input, shape index: {}]
  %s1 = inlined_call_operand.vmem [shape: f32[8,4], index: 1, kind: input, shape index: {}]
  %s2 = inlined_call_operand.hbm [shape: bf16[12,32], index: 2, kind: input, shape index: {}]
  %s3 = inlined_call_operand.hbm [shape: bf16[4,32], index: 3, kind: input, shape index: {}]
  %s4 = inlined_call_operand.hbm [shape: f32[1,32], index: 4, kind: input, shape index: {}]
  %s5 = inlined_call_operand.vmem [shape: bf16[32,32], index: 5, kind: input, shape index: {}]
  %s6 = inlined_call_operand.hbm [shape: f32[1,32], index: 6, kind: input, shape index: {}]
  %s7 = inlined_call_operand.vmem [shape: bf16[32,32], index: 7, kind: input, shape index: {}]
  %s8 = inlined_call_operand.hbm [shape: f32[1,32], index: 8, kind: input, shape index: {}]
  %s9 = inlined_call_operand.vmem [shape: bf16[32,32], index: 9, kind: input, shape index: {}]
  %s10 = inlined_call_operand.hbm [shape: f32[1,32], index: 10, kind: input, shape index: {}]
  %s11 = inlined_call_operand.vmem [shape: bf16[32,8], index: 11, kind: input, shape index: {}]
  %s12 = inlined_call_operand.vmem [shape: f32[1,8], index: 12, kind: input, shape index: {}]
  %s13 = inlined_call_operand.hbm [shape: f32[8,8], index: 13, kind: output, shape index: {}]
  %s14 = sld [smem:[#allocation0]]
  $region90: #{tpu_custom_call.1} parent=0
    _
  %s16 = ssub.s32 1, %s14
  %s17 = scalar_select 0, %s16, %s14
  $region1: #{tpu_custom_call.1} parent=0
    #allocation2 [shape = 'u8[4096]{0}', space=vmem, size = 0x1000, scoped, tag = 'input window, operand 0, single buffered']
    #allocation3 [shape = 's32[1]{0}', space=sflag, size = 0x4, scoped, tag = 'scoped memory for tpu_custom_call.1']
    #allocation4 [shape = 's32[1]{0}', space=sflag, size = 0x4, scoped, tag = 'scoped memory for tpu_custom_call.1']
    #allocation5 [shape = 'u8[4096]{0}', space=vmem, size = 0x1000, scoped, tag = 'input window, operand 2, single buffered']
    #allocation6 [shape = 's32[1]{0}', space=sflag, size = 0x4, scoped, tag = 'scoped memory for tpu_custom_call.1']
    #allocation7 [shape = 'u8[1024]{0}', space=vmem, size = 0x400, scoped, tag = 'input window, operand 3, single buffered']
    #allocation8 [shape = 'u8[512]{0}', space=vmem, size = 0x400, scoped, tag = 'input window, operand 4, single buffered']
    #allocation9 [shape = 's32[1]{0}', space=sflag, size = 0x4, scoped, tag = 'scoped memory for tpu_custom_call.1']
    #allocation10 [shape = 'u8[512]{0}', space=vmem, size = 0x400, scoped, tag = 'input window, operand 6, single buffered']
    #allocation11 [shape = 'u8[512]{0}', space=vmem, size = 0x400, scoped, tag = 'input window, operand 8, single buffered']
    #allocation12 [shape = 's32[1]{0}', space=sflag, size = 0x4, scoped, tag = 'scoped memory for tpu_custom_call.1']
    #allocation13 [shape = 'u8[512]{0}', space=vmem, size = 0x400, scoped, tag = 'input window, operand 10, single buffered']
    #allocation14 [shape = 'u8[4096]{0}', space=vmem, size = 0x1000, scoped, tag = 'output window, operand 0, single buffered']
    %18 = vsyncpa [#allocation3], 0
    %19 = vsyncpa [#allocation6], 0
    %20 = vsyncpa [#allocation9], 0
    %21 = vsyncpa [#allocation12], 0
    %22 = vsyncpa [#allocation4], 0
    // Predicated region
    $region2: #{tpu_custom_call.1} parent=1 // pred_check
      _
    $region3: #{tpu_custom_call.1} parent=1 // pred_check_branch
      %24 = sbr.rel (0) target = $region5
    $region4: #{tpu_custom_call.1} parent=1 // pred_region
      %s26 = ssub.s32 128, 128
      %27 = vsyncadd [#allocation3], %s26
      %s29 = sshll.u32 [#allocation2], 4
      %s30 = int_to_ptr.vmem [resolvable:$true] %s29
      %32 = dma.hbm_to_vmem [thread:$0]  %s0, 128, %s30, [#allocation3]
    $region5: #{tpu_custom_call.1} parent=1 // pred_fallthru
      _
    // Predicated region
    $region6: #{tpu_custom_call.1} parent=1 // pred_check
      _
    $region7: #{tpu_custom_call.1} parent=1 // pred_check_branch
      %34 = sbr.rel (0) target = $region9
    $region8: #{tpu_custom_call.1} parent=1 // pred_region
      _
    $region9: #{tpu_custom_call.1} parent=1 // pred_fallthru
      _
    // Predicated region
    $region10: #{tpu_custom_call.1} parent=1 // pred_check
      _
    $region11: #{tpu_custom_call.1} parent=1 // pred_check_branch
      %36 = sbr.rel (0) target = $region13
    $region12: #{tpu_custom_call.1} parent=1 // pred_region
      %s38 = ssub.s32 128, 128
      %39 = vsyncadd [#allocation6], %s38
      %s40 = sshll.u32 [#allocation5], 4
      %s41 = int_to_ptr.vmem [resolvable:$true] %s40
      %46 = dma.hbm_to_vmem [thread:$0]  %s2, 128, %s41, [#allocation6], 64, 64, 4
    $region13: #{tpu_custom_call.1} parent=1 // pred_fallthru
      _
    // Predicated region
    $region14: #{tpu_custom_call.1} parent=1 // pred_check
      _
    $region15: #{tpu_custom_call.1} parent=1 // pred_check_branch
      %48 = sbr.rel (0) target = $region17
    $region16: #{tpu_custom_call.1} parent=1 // pred_region
      %s50 = ssub.s32 32, 32
      %51 = vsyncadd [#allocation6], %s50
      %s53 = sshll.u32 [#allocation7], 4
      %s54 = int_to_ptr.vmem [resolvable:$true] %s53
      %56 = dma.hbm_to_vmem [thread:$0]  %s3, 32, %s54, [#allocation6]
    $region17: #{tpu_custom_call.1} parent=1 // pred_fallthru
      _
    // Predicated region
    $region18: #{tpu_custom_call.1} parent=1 // pred_check
      _
    $region19: #{tpu_custom_call.1} parent=1 // pred_check_branch
      %58 = sbr.rel (0) target = $region21
    $region20: #{tpu_custom_call.1} parent=1 // pred_region
      %s60 = ssub.s32 16, 16
      %61 = vsyncadd [#allocation9], %s60
      %s63 = sshll.u32 [#allocation8], 4
      %s64 = int_to_ptr.vmem [resolvable:$true] %s63
      %66 = dma.hbm_to_vmem [thread:$0]  %s4, 16, %s64, [#allocation9]
    $region21: #{tpu_custom_call.1} parent=1 // pred_fallthru
      _
    // Predicated region
    $region22: #{tpu_custom_call.1} parent=1 // pred_check
      _
    $region23: #{tpu_custom_call.1} parent=1 // pred_check_branch
      %68 = sbr.rel (0) target = $region25
    $region24: #{tpu_custom_call.1} parent=1 // pred_region
      _
    $region25: #{tpu_custom_call.1} parent=1 // pred_fallthru
      _
    // Predicated region
    $region26: #{tpu_custom_call.1} parent=1 // pred_check
      _
    $region27: #{tpu_custom_call.1} parent=1 // pred_check_branch
      %70 = sbr.rel (0) target = $region29
    $region28: #{tpu_custom_call.1} parent=1 // pred_region
      %s72 = ssub.s32 16, 16
      %73 = vsyncadd [#allocation9], %s72
      %s75 = sshll.u32 [#allocation10], 4
      %s76 = int_to_ptr.vmem [resolvable:$true] %s75
      %78 = dma.hbm_to_vmem [thread:$0]  %s6, 16, %s76, [#allocation9]
    $region29: #{tpu_custom_call.1} parent=1 // pred_fallthru
      _
    // Predicated region
    $region30: #{tpu_custom_call.1} parent=1 // pred_check
      _
    $region31: #{tpu_custom_call.1} parent=1 // pred_check_branch
      %80 = sbr.rel (0) target = $region33
    $region32: #{tpu_custom_call.1} parent=1 // pred_region
      _
    $region33: #{tpu_custom_call.1} parent=1 // pred_fallthru
      _
    // Predicated region
    $region34: #{tpu_custom_call.1} parent=1 // pred_check
      _
    $region35: #{tpu_custom_call.1} parent=1 // pred_check_branch
      %82 = sbr.rel (0) target = $region37
    $region36: #{tpu_custom_call.1} parent=1 // pred_region
      %s84 = ssub.s32 16, 16
      %85 = vsyncadd [#allocation12], %s84
      %s87 = sshll.u32 [#allocation11], 4
      %s88 = int_to_ptr.vmem [resolvable:$true] %s87
      %90 = dma.hbm_to_vmem [thread:$0]  %s8, 16, %s88, [#allocation12]
    $region37: #{tpu_custom_call.1} parent=1 // pred_fallthru
      _
    // Predicated region
    $region38: #{tpu_custom_call.1} parent=1 // pred_check
      _
    $region39: #{tpu_custom_call.1} parent=1 // pred_check_branch
      %92 = sbr.rel (0) target = $region41
    $region40: #{tpu_custom_call.1} parent=1 // pred_region
      _
    $region41: #{tpu_custom_call.1} parent=1 // pred_fallthru
      _
    // Predicated region
    $region42: #{tpu_custom_call.1} parent=1 // pred_check
      _
    $region43: #{tpu_custom_call.1} parent=1 // pred_check_branch
      %94 = sbr.rel (0) target = $region45
    $region44: #{tpu_custom_call.1} parent=1 // pred_region
      %s96 = ssub.s32 16, 16
      %97 = vsyncadd [#allocation12], %s96
      %s99 = sshll.u32 [#allocation13], 4
      %s100 = int_to_ptr.vmem [resolvable:$true] %s99
      %102 = dma.hbm_to_vmem [thread:$0]  %s10, 16, %s100, [#allocation12]
    $region45: #{tpu_custom_call.1} parent=1 // pred_fallthru
      _
    // Predicated region
    $region46: #{tpu_custom_call.1} parent=1 // pred_check
      _
    $region47: #{tpu_custom_call.1} parent=1 // pred_check_branch
      %104 = sbr.rel (0) target = $region49
    $region48: #{tpu_custom_call.1} parent=1 // pred_region
      _
    $region49: #{tpu_custom_call.1} parent=1 // pred_fallthru
      _
    // Predicated region
    $region50: #{tpu_custom_call.1} parent=1 // pred_check
      _
    $region51: #{tpu_custom_call.1} parent=1 // pred_check_branch
      %106 = sbr.rel (0) target = $region53
    $region52: #{tpu_custom_call.1} parent=1 // pred_region
      _
    $region53: #{tpu_custom_call.1} parent=1 // pred_fallthru
      _
    // Predicated region
    $region54: #{tpu_custom_call.1} parent=1 // pred_check
      _
    $region55: #{tpu_custom_call.1} parent=1 // pred_check_branch
      %108 = sbr.rel (0) target = $region57
    $region56: #{tpu_custom_call.1} parent=1 // pred_region
      %109 = dma.done [#allocation3], 128
    $region57: #{tpu_custom_call.1} parent=1 // pred_fallthru
      _
    // Predicated region
    $region58: #{tpu_custom_call.1} parent=1 // pred_check
      _
    $region59: #{tpu_custom_call.1} parent=1 // pred_check_branch
      %111 = sbr.rel (0) target = $region61
    $region60: #{tpu_custom_call.1} parent=1 // pred_region
      %112 = dma.done [#allocation6], 128
    $region61: #{tpu_custom_call.1} parent=1 // pred_fallthru
      _
    // Predicated region
    $region62: #{tpu_custom_call.1} parent=1 // pred_check
      _
    $region63: #{tpu_custom_call.1} parent=1 // pred_check_branch
      %114 = sbr.rel (0) target = $region65
    $region64: #{tpu_custom_call.1} parent=1 // pred_region
      %115 = dma.done [#allocation6], 32
    $region65: #{tpu_custom_call.1} parent=1 // pred_fallthru
      _
    // Predicated region
    $region66: #{tpu_custom_call.1} parent=1 // pred_check
      _
    $region67: #{tpu_custom_call.1} parent=1 // pred_check_branch
      %117 = sbr.rel (0) target = $region69
    $region68: #{tpu_custom_call.1} parent=1 // pred_region
      %118 = dma.done [#allocation9], 16
    $region69: #{tpu_custom_call.1} parent=1 // pred_fallthru
      _
    // Predicated region
    $region70: #{tpu_custom_call.1} parent=1 // pred_check
      _
    $region71: #{tpu_custom_call.1} parent=1 // pred_check_branch
      %120 = sbr.rel (0) target = $region73
    $region72: #{tpu_custom_call.1} parent=1 // pred_region
      %121 = dma.done [#allocation9], 16
    $region73: #{tpu_custom_call.1} parent=1 // pred_fallthru
      _
    // Predicated region
    $region74: #{tpu_custom_call.1} parent=1 // pred_check
      _
    $region75: #{tpu_custom_call.1} parent=1 // pred_check_branch
      %123 = sbr.rel (0) target = $region77
    $region76: #{tpu_custom_call.1} parent=1 // pred_region
      %124 = dma.done [#allocation12], 16
    $region77: #{tpu_custom_call.1} parent=1 // pred_fallthru
      _
    // Predicated region
    $region78: #{tpu_custom_call.1} parent=1 // pred_check
      _
    $region79: #{tpu_custom_call.1} parent=1 // pred_check_branch
      %126 = sbr.rel (0) target = $region81
    $region80: #{tpu_custom_call.1} parent=1 // pred_region
      %127 = dma.done [#allocation12], 16
    $region81: #{tpu_custom_call.1} parent=1 // pred_fallthru
      _
    %v129 = vld [vmem:[#allocation2] sm:$0xff]
    %v130 = vpack.c.bf16 %v129, %v129
    %v131 = vld [vmem:[#allocation5] sm:$0xf]
    %v132 = vld [vmem:[#allocation5 + $0x4] sm:$0x3]
    %v133 = vld [vmem:[%s1] sm:$0xff]
    %v134 = vpack.c.bf16 %v133, %v133
    %v135 = vld [vmem:[#allocation7] sm:$0x3]
    %vm136 = vcmask 31744
    %v138 = vsel %vm136, %v134, 0
    %vm140 = vcmask 1041408
    %v142 = vsel %vm140, %v135, 0
    %144 = vmatprep.subr.bf16.mxu0 0
    %145 = vmatpush1.bf16.msra.mxu0 0
    %146 = vmatprep.subr.bf16.mxu0 0
    %147 = vmatpush1.bf16.msra.mxu0 0
    %148 = vmatprep.subr.bf16.mxu0 0
    %149 = vmatpush1.bf16.msra.mxu0 0
    %150 = vmatprep.subr.bf16.mxu0 0
    %151 = vmatpush1.bf16.msra.mxu0 0
    %152 = vmatprep.subr.bf16.mxu0 0
    %153 = vmatpush1.bf16.msra.mxu0 0
    %154 = vmatprep.subr.bf16.mxu0 0
    %155 = vmatpush1.bf16.msra.mxu0 0
    %156 = vmatprep.subr.bf16.mxu0 0
    %157 = vmatpush1.bf16.msra.mxu0 0
    %158 = vmatprep.subr.bf16.mxu0 0
    %159 = vmatpush1.bf16.msra.mxu0 %v142
    %160 = vmatprep.subr.bf16.mxu0 0
    %161 = vmatpush2.bf16.msra.mxu0 0
    %162 = vmatprep.subr.bf16.mxu0 0
    %163 = vmatpush2.bf16.msra.mxu0 0
    %164 = vmatprep.subr.bf16.mxu0 0
    %165 = vmatpush2.bf16.msra.mxu0 0
    %166 = vmatprep.subr.bf16.mxu0 0
    %167 = vmatpush2.bf16.msra.mxu0 0
    %168 = vmatprep.subr.bf16.mxu0 0
    %169 = vmatpush2.bf16.msra.mxu0 0
    %170 = vmatprep.subr.bf16.mxu0 0
    %171 = vmatpush2.bf16.msra.mxu0 0
    %172 = vmatprep.subr.bf16.mxu0 0
    %173 = vmatpush2.bf16.msra.mxu0 0
    %174 = vmatprep.subr.bf16.mxu0 0
    %175 = vmatpush2.bf16.msra.mxu0 0
    %176 = vmatprep.mubr.bf16.mxu0 0
    %177 = vmatmul.mubr.bf16.gmra.mxu0 %v138
    %v178 = vpop.f32.mrf.mxu0
    %v179 = vadd.f32 0.0, %v178
    %v180 = vpop.f32.mrf.mxu0
    %v181 = vpop.f32.mrf.mxu0
    %v182 = vpop.f32.mrf.mxu0
    %183 = vdwg.mxu0
    %v186 = vunpack.c.l.b16 %v131
    %v187 = vunpack.c.l.b16 %v132
    %v188 = vpack.c.b16 %v187, %v186
    %vm189 = vcmask 97280
    %v191 = vsel %vm189, %v130, 0
    %vm193 = vcmask 1045504
    %v195 = vsel %vm193, %v188, 0
    %197 = vmatprep.subr.bf16.mxu0 0
    %198 = vmatpush1.bf16.msra.mxu0 0
    %199 = vmatprep.subr.bf16.mxu0 0
    %200 = vmatpush1.bf16.msra.mxu0 0
    %201 = vmatprep.subr.bf16.mxu0 0
    %202 = vmatpush1.bf16.msra.mxu0 0
    %203 = vmatprep.subr.bf16.mxu0 0
    %204 = vmatpush1.bf16.msra.mxu0 0
    %205 = vmatprep.subr.bf16.mxu0 0
    %206 = vmatpush1.bf16.msra.mxu0 0
    %207 = vmatprep.subr.bf16.mxu0 0
    %208 = vmatpush1.bf16.msra.mxu0 0
    %209 = vmatprep.subr.bf16.mxu0 0
    %210 = vmatpush1.bf16.msra.mxu0 0
    %211 = vmatprep.subr.bf16.mxu0 0
    %212 = vmatpush1.bf16.msra.mxu0 %v195
    %213 = vmatprep.subr.bf16.mxu0 0
    %214 = vmatpush2.bf16.msra.mxu0 0
    %215 = vmatprep.subr.bf16.mxu0 0
    %216 = vmatpush2.bf16.msra.mxu0 0
    %217 = vmatprep.subr.bf16.mxu0 0
    %218 = vmatpush2.bf16.msra.mxu0 0
    %219 = vmatprep.subr.bf16.mxu0 0
    %220 = vmatpush2.bf16.msra.mxu0 0
    %221 = vmatprep.subr.bf16.mxu0 0
    %222 = vmatpush2.bf16.msra.mxu0 0
    %223 = vmatprep.subr.bf16.mxu0 0
    %224 = vmatpush2.bf16.msra.mxu0 0
    %225 = vmatprep.subr.bf16.mxu0 0
    %226 = vmatpush2.bf16.msra.mxu0 0
    %227 = vmatprep.subr.bf16.mxu0 0
    %228 = vmatpush2.bf16.msra.mxu0 0
    %229 = vmatprep.mubr.bf16.mxu0 0
    %230 = vmatmul.mubr.bf16.gmra.mxu0 %v191
    %v231 = vpop.f32.mrf.mxu0
    %v232 = vadd.f32 %v179, %v231
    %v233 = vpop.f32.mrf.mxu0
    %v234 = vpop.f32.mrf.mxu0
    %v235 = vpop.f32.mrf.mxu0
    %236 = vdwg.mxu0
    %v237 = vld [vmem:[#allocation8] sm:$0x1]
    %v239 = vlaneseq
    %v240 = vshrl.u32 %v239, 7
    %v241 = vsub.s32 0, %v240
    %v242 = vrot.slane %v237, %v241
    %v244 = vadd.f32 %v232, %v242
    %vm245 = vcmp.gt.f32.partialorder %v244, 0.0
    %v246 = vmul.f32 %v244, 0.01
    %v247 = vsel %vm245, %v244, %v246
    %v248 = vpack.c.bf16 %v247, %v247
    %v249 = vld [vmem:[%s5] sm:$0xf]
    %v250 = vld [vmem:[%s5 + $0x4] sm:$0xf]
    %v251 = vld [vmem:[%s5 + $0x8] sm:$0xf]
    %v252 = vld [vmem:[%s5 + $0xc] sm:$0xf]
    %v253 = vld [vmem:[#allocation10] sm:$0x1]
    %v255 = vlaneseq
    %v256 = vshrl.u32 %v255, 7
    %v257 = vsub.s32 0, %v256
    %v258 = vrot.slane %v253, %v257
    %v264 = vunpack.c.l.b16 %v249
    %v265 = vunpack.c.l.b16 %v250
    %v266 = vunpack.c.l.b16 %v251
    %v267 = vunpack.c.l.b16 %v252
    %v268 = vpack.c.b16 %v265, %v264
    %v269 = vpack.c.b16 %v267, %v266
    %vm272 = vcmask 261120
    %v274 = vsel %vm272, %v248, 0
    %276 = vmatprep.subr.bf16.mxu0 0
    %277 = vmatpush1.bf16.msra.mxu0 0
    %278 = vmatprep.subr.bf16.mxu0 0
    %279 = vmatpush1.bf16.msra.mxu0 0
    %280 = vmatprep.subr.bf16.mxu0 0
    %281 = vmatpush1.bf16.msra.mxu0 0
    %282 = vmatprep.subr.bf16.mxu0 0
    %283 = vmatpush1.bf16.msra.mxu0 0
    %284 = vmatprep.subr.bf16.mxu0 0
    %285 = vmatpush1.bf16.msra.mxu0 0
    %286 = vmatprep.subr.bf16.mxu0 0
    %287 = vmatpush1.bf16.msra.mxu0 0
    %288 = vmatprep.subr.bf16.mxu0 0
    %289 = vmatpush1.bf16.msra.mxu0 %v269
    %290 = vmatprep.subr.bf16.mxu0 0
    %291 = vmatpush1.bf16.msra.mxu0 %v268
    %292 = vmatprep.subr.bf16.mxu0 0
    %293 = vmatpush2.bf16.msra.mxu0 0
    %294 = vmatprep.subr.bf16.mxu0 0
    %295 = vmatpush2.bf16.msra.mxu0 0
    %296 = vmatprep.subr.bf16.mxu0 0
    %297 = vmatpush2.bf16.msra.mxu0 0
    %298 = vmatprep.subr.bf16.mxu0 0
    %299 = vmatpush2.bf16.msra.mxu0 0
    %300 = vmatprep.subr.bf16.mxu0 0
    %301 = vmatpush2.bf16.msra.mxu0 0
    %302 = vmatprep.subr.bf16.mxu0 0
    %303 = vmatpush2.bf16.msra.mxu0 0
    %304 = vmatprep.subr.bf16.mxu0 0
    %305 = vmatpush2.bf16.msra.mxu0 0
    %306 = vmatprep.subr.bf16.mxu0 0
    %307 = vmatpush2.bf16.msra.mxu0 0
    %308 = vmatprep.mubr.bf16.mxu0 0
    %309 = vmatmul.mubr.bf16.gmra.mxu0 %v274
    %v310 = vpop.f32.mrf.mxu0
    %v311 = vadd.f32 %v258, %v310
    %v312 = vpop.f32.mrf.mxu0
    %v313 = vpop.f32.mrf.mxu0
    %v314 = vpop.f32.mrf.mxu0
    %315 = vdwg.mxu0
    %vm316 = vcmp.gt.f32.partialorder %v311, 0.0
    %v317 = vmul.f32 %v311, 0.01
    %v318 = vsel %vm316, %v311, %v317
    %v319 = vpack.c.bf16 %v318, %v318
    %v320 = vld [vmem:[%s7] sm:$0xf]
    %v321 = vld [vmem:[%s7 + $0x4] sm:$0xf]
    %v322 = vld [vmem:[%s7 + $0x8] sm:$0xf]
    %v323 = vld [vmem:[%s7 + $0xc] sm:$0xf]
    %v324 = vld [vmem:[#allocation11] sm:$0x1]
    %v326 = vlaneseq
    %v327 = vshrl.u32 %v326, 7
    %v328 = vsub.s32 0, %v327
    %v329 = vrot.slane %v324, %v328
    %v335 = vunpack.c.l.b16 %v320
    %v336 = vunpack.c.l.b16 %v321
    %v337 = vunpack.c.l.b16 %v322
    %v338 = vunpack.c.l.b16 %v323
    %v339 = vpack.c.b16 %v336, %v335
    %v340 = vpack.c.b16 %v338, %v337
    %v344 = vsel %vm272, %v319, 0
    %346 = vmatprep.subr.bf16.mxu0 0
    %347 = vmatpush1.bf16.msra.mxu0 0
    %348 = vmatprep.subr.bf16.mxu0 0
    %349 = vmatpush1.bf16.msra.mxu0 0
    %350 = vmatprep.subr.bf16.mxu0 0
    %351 = vmatpush1.bf16.msra.mxu0 0
    %352 = vmatprep.subr.bf16.mxu0 0
    %353 = vmatpush1.bf16.msra.mxu0 0
    %354 = vmatprep.subr.bf16.mxu0 0
    %355 = vmatpush1.bf16.msra.mxu0 0
    %356 = vmatprep.subr.bf16.mxu0 0
    %357 = vmatpush1.bf16.msra.mxu0 0
    %358 = vmatprep.subr.bf16.mxu0 0
    %359 = vmatpush1.bf16.msra.mxu0 %v340
    %360 = vmatprep.subr.bf16.mxu0 0
    %361 = vmatpush1.bf16.msra.mxu0 %v339
    %362 = vmatprep.subr.bf16.mxu0 0
    %363 = vmatpush2.bf16.msra.mxu0 0
    %364 = vmatprep.subr.bf16.mxu0 0
    %365 = vmatpush2.bf16.msra.mxu0 0
    %366 = vmatprep.subr.bf16.mxu0 0
    %367 = vmatpush2.bf16.msra.mxu0 0
    %368 = vmatprep.subr.bf16.mxu0 0
    %369 = vmatpush2.bf16.msra.mxu0 0
    %370 = vmatprep.subr.bf16.mxu0 0
    %371 = vmatpush2.bf16.msra.mxu0 0
    %372 = vmatprep.subr.bf16.mxu0 0
    %373 = vmatpush2.bf16.msra.mxu0 0
    %374 = vmatprep.subr.bf16.mxu0 0
    %375 = vmatpush2.bf16.msra.mxu0 0
    %376 = vmatprep.subr.bf16.mxu0 0
    %377 = vmatpush2.bf16.msra.mxu0 0
    %378 = vmatprep.mubr.bf16.mxu0 0
    %379 = vmatmul.mubr.bf16.gmra.mxu0 %v344
    %v380 = vpop.f32.mrf.mxu0
    %v381 = vadd.f32 %v329, %v380
    %v382 = vpop.f32.mrf.mxu0
    %v383 = vpop.f32.mrf.mxu0
    %v384 = vpop.f32.mrf.mxu0
    %385 = vdwg.mxu0
    %vm386 = vcmp.gt.f32.partialorder %v381, 0.0
    %v387 = vmul.f32 %v381, 0.01
    %v388 = vsel %vm386, %v381, %v387
    %v389 = vpack.c.bf16 %v388, %v388
    %v390 = vld [vmem:[%s9] sm:$0xf]
    %v391 = vld [vmem:[%s9 + $0x4] sm:$0xf]
    %v392 = vld [vmem:[%s9 + $0x8] sm:$0xf]
    %v393 = vld [vmem:[%s9 + $0xc] sm:$0xf]
    %v394 = vld [vmem:[#allocation13] sm:$0x1]
    %v396 = vlaneseq
    %v397 = vshrl.u32 %v396, 7
    %v398 = vsub.s32 0, %v397
    %v399 = vrot.slane %v394, %v398
    %v405 = vunpack.c.l.b16 %v390
    %v406 = vunpack.c.l.b16 %v391
    %v407 = vunpack.c.l.b16 %v392
    %v408 = vunpack.c.l.b16 %v393
    %v409 = vpack.c.b16 %v406, %v405
    %v410 = vpack.c.b16 %v408, %v407
    %v414 = vsel %vm272, %v389, 0
    %416 = vmatprep.subr.bf16.mxu0 0
    %417 = vmatpush1.bf16.msra.mxu0 0
    %418 = vmatprep.subr.bf16.mxu0 0
    %419 = vmatpush1.bf16.msra.mxu0 0
    %420 = vmatprep.subr.bf16.mxu0 0
    %421 = vmatpush1.bf16.msra.mxu0 0
    %422 = vmatprep.subr.bf16.mxu0 0
    %423 = vmatpush1.bf16.msra.mxu0 0
    %424 = vmatprep.subr.bf16.mxu0 0
    %425 = vmatpush1.bf16.msra.mxu0 0
    %426 = vmatprep.subr.bf16.mxu0 0
    %427 = vmatpush1.bf16.msra.mxu0 0
    %428 = vmatprep.subr.bf16.mxu0 0
    %429 = vmatpush1.bf16.msra.mxu0 %v410
    %430 = vmatprep.subr.bf16.mxu0 0
    %431 = vmatpush1.bf16.msra.mxu0 %v409
    %432 = vmatprep.subr.bf16.mxu0 0
    %433 = vmatpush2.bf16.msra.mxu0 0
    %434 = vmatprep.subr.bf16.mxu0 0
    %435 = vmatpush2.bf16.msra.mxu0 0
    %436 = vmatprep.subr.bf16.mxu0 0
    %437 = vmatpush2.bf16.msra.mxu0 0
    %438 = vmatprep.subr.bf16.mxu0 0
    %439 = vmatpush2.bf16.msra.mxu0 0
    %440 = vmatprep.subr.bf16.mxu0 0
    %441 = vmatpush2.bf16.msra.mxu0 0
    %442 = vmatprep.subr.bf16.mxu0 0
    %443 = vmatpush2.bf16.msra.mxu0 0
    %444 = vmatprep.subr.bf16.mxu0 0
    %445 = vmatpush2.bf16.msra.mxu0 0
    %446 = vmatprep.subr.bf16.mxu0 0
    %447 = vmatpush2.bf16.msra.mxu0 0
    %448 = vmatprep.mubr.bf16.mxu0 0
    %449 = vmatmul.mubr.bf16.gmra.mxu0 %v414
    %v450 = vpop.f32.mrf.mxu0
    %v451 = vadd.f32 %v399, %v450
    %v452 = vpop.f32.mrf.mxu0
    %v453 = vpop.f32.mrf.mxu0
    %v454 = vpop.f32.mrf.mxu0
    %455 = vdwg.mxu0
    %vm456 = vcmp.gt.f32.partialorder %v451, 0.0
    %v457 = vmul.f32 %v451, 0.01
    %v458 = vsel %vm456, %v451, %v457
    %v459 = vpack.c.bf16 %v458, %v458
    %v460 = vld [vmem:[%s11] sm:$0xf]
    %v461 = vld [vmem:[%s11 + $0x4] sm:$0xf]
    %v462 = vld [vmem:[%s11 + $0x8] sm:$0xf]
    %v463 = vld [vmem:[%s11 + $0xc] sm:$0xf]
    %v464 = vld [vmem:[%s12] sm:$0x1]
    %v466 = vlaneseq
    %v467 = vshrl.u32 %v466, 7
    %v468 = vsub.s32 0, %v467
    %v469 = vrot.slane %v464, %v468
    %v475 = vunpack.c.l.b16 %v460
    %v476 = vunpack.c.l.b16 %v461
    %v477 = vunpack.c.l.b16 %v462
    %v478 = vunpack.c.l.b16 %v463
    %v479 = vpack.c.b16 %v476, %v475
    %v480 = vpack.c.b16 %v478, %v477
    %v484 = vsel %vm272, %v459, 0
    %486 = vmatprep.subr.bf16.mxu0 0
    %487 = vmatpush1.bf16.msra.mxu0 0
    %488 = vmatprep.subr.bf16.mxu0 0
    %489 = vmatpush1.bf16.msra.mxu0 0
    %490 = vmatprep.subr.bf16.mxu0 0
    %491 = vmatpush1.bf16.msra.mxu0 0
    %492 = vmatprep.subr.bf16.mxu0 0
    %493 = vmatpush1.bf16.msra.mxu0 0
    %494 = vmatprep.subr.bf16.mxu0 0
    %495 = vmatpush1.bf16.msra.mxu0 0
    %496 = vmatprep.subr.bf16.mxu0 0
    %497 = vmatpush1.bf16.msra.mxu0 0
    %498 = vmatprep.subr.bf16.mxu0 0
    %499 = vmatpush1.bf16.msra.mxu0 %v480
    %500 = vmatprep.subr.bf16.mxu0 0
    %501 = vmatpush1.bf16.msra.mxu0 %v479
    %502 = vmatprep.subr.bf16.mxu0 0
    %503 = vmatpush2.bf16.msra.mxu0 0
    %504 = vmatprep.subr.bf16.mxu0 0
    %505 = vmatpush2.bf16.msra.mxu0 0
    %506 = vmatprep.subr.bf16.mxu0 0
    %507 = vmatpush2.bf16.msra.mxu0 0
    %508 = vmatprep.subr.bf16.mxu0 0
    %509 = vmatpush2.bf16.msra.mxu0 0
    %510 = vmatprep.subr.bf16.mxu0 0
    %511 = vmatpush2.bf16.msra.mxu0 0
    %512 = vmatprep.subr.bf16.mxu0 0
    %513 = vmatpush2.bf16.msra.mxu0 0
    %514 = vmatprep.subr.bf16.mxu0 0
    %515 = vmatpush2.bf16.msra.mxu0 0
    %516 = vmatprep.subr.bf16.mxu0 0
    %517 = vmatpush2.bf16.msra.mxu0 0
    %518 = vmatprep.mubr.bf16.mxu0 0
    %519 = vmatmul.mubr.bf16.gmra.mxu0 %v484
    %v520 = vpop.f32.mrf.mxu0
    %v521 = vadd.f32 %v469, %v520
    %v522 = vpop.f32.mrf.mxu0
    %v523 = vpop.f32.mrf.mxu0
    %v524 = vpop.f32.mrf.mxu0
    %525 = vdwg.mxu0
    %vm526 = vcmask 64512
    %v527 = vsel %vm526, %v521, -inf
    %528 = vmax.xlane.f32.xlu0 %v527
    %v529 = vpop.xlane.xlu0 %528
    %v530 = vsub.f32 %v521, %v529
    %v531 = vmul.f32 %v530, 1.442695
    %v532 = vpow.pop %v531
    %v533 = vsel %vm526, %v532, 0.0
    %534 = vadd.xlane.f32.xlu0 %v533
    %v535 = vpop.xlane.xlu0 %534
    %v536 = vrcp.pop %v535
    %v537 = vmul.f32 %v532, %v536
    %538 = vst.msk [vmem:[#allocation14] sm:$0xff] %vm526, %v537
    // Predicated region
    $region82: #{tpu_custom_call.1} parent=1 // pred_check
      _
    $region83: #{tpu_custom_call.1} parent=1 // pred_check_branch
      %540 = sbr.rel (0) target = $region85
    $region84: #{tpu_custom_call.1} parent=1 // pred_region
      %s542 = ssub.s32 128, 128
      %543 = vsyncadd [#allocation4], %s542
      %s545 = sshll.u32 [#allocation14], 4
      %s546 = int_to_ptr.vmem [resolvable:$true] %s545
      %548 = dma.vmem_to_hbm [thread:$0]  %s546, 128, %s13, [#allocation4]
    $region85: #{tpu_custom_call.1} parent=1 // pred_fallthru
      _
    // Predicated region
    $region86: #{tpu_custom_call.1} parent=1 // pred_check
      _
    $region87: #{tpu_custom_call.1} parent=1 // pred_check_branch
      %550 = sbr.rel (0) target = $region89
    $region88: #{tpu_custom_call.1} parent=1 // pred_region
      %551 = dma.done [#allocation4], 128
    $region89: #{tpu_custom_call.1} parent=1 // pred_fallthru
      _
    %552 = vsyncpa [#allocation3], 1
    %553 = vsyncpa [#allocation6], 1
    %554 = vsyncpa [#allocation9], 1
    %555 = vsyncpa [#allocation12], 1
    %556 = vsyncpa [#allocation4], 1

</llo_original>
